<compile_context>
chip_gen: v7x
topology: tpu7x:2x2x1
jax: 0.10.0
libtpu: 0.0.40
codegen_flags: <defaults>
</compile_context>

<pallas_src>
import jax
import jax.numpy as jnp
from jax.experimental import pallas as pl
from jax.experimental.pallas import tpu as pltpu

AA = "ARNDCQEGHILKMFPSTWYV"
AA_DICT = {aa: i + 1 for i, aa in enumerate(AA)}
VOCAB_SIZE = len(AA) + 1      # 21 (index 0 is padding)
E_PAD = 128                   # lane-dense embedding width inside the kernel
MIN_BUCKET = 128              # smallest fixed-shape length bucket
DEFAULT_TILE = 512            # rows per grid step


def _embed_kernel(idx_ref, table_ref, out_ref):
    # idx_ref:   (TL, 1)      int32   in VMEM
    # table_ref: (V, E_PAD)   float32 in VMEM (scale already folded in)
    # out_ref:   (TL, E_PAD)  float32 in VMEM (lane-dense)
    idx = idx_ref[...]                                   # (TL, 1)
    tl = idx.shape[0]
    v = table_ref.shape[0]
    vocab_iota = jax.lax.broadcasted_iota(jnp.int32, (tl, v), 1)
    onehot = (vocab_iota == idx).astype(jnp.float32)     # (TL, V) exact gather
    out_ref[...] = jnp.dot(onehot, table_ref[...],
                           preferred_element_type=jnp.float32)


def _bucket_len(n: int) -> int:
    """Fixed-shape power-of-2 length bucket (avoids per-length recompiles)."""
    return max(MIN_BUCKET, int(pl.next_power_of_2(max(int(n), 1))))


def pallas_embedding_lookup(indices: jnp.ndarray,
                            table_padded: jnp.ndarray,
                            *, tile: int = DEFAULT_TILE) -> jnp.ndarray:
    """indices: (L,) int; table_padded: (V, E_PAD) f32 -> (L, E_PAD) f32."""
    L = int(indices.shape[0])
    V, e_pad = table_padded.shape

    bucket = _bucket_len(L)
    tl = min(tile, bucket)
    num_tiles = bucket // tl

    # Pad indices with 0 (padding idx -> zero rows; scale folded in keeps them 0).
    idx = jnp.zeros((bucket,), dtype=jnp.int32).at[:L].set(
        indices.astype(jnp.int32))
    idx2d = idx.reshape(bucket, 1)

    cost = pl.CostEstimate(
        flops=2 * bucket * V * e_pad,
        transcendentals=0,
        bytes_accessed=4 * (bucket + V * e_pad + bucket * e_pad),
    )

    out = pl.pallas_call(
        _embed_kernel,
        out_shape=jax.ShapeDtypeStruct((bucket, e_pad), jnp.float32),
        grid=(num_tiles,),
        in_specs=[
            pl.BlockSpec((tl, 1), lambda i: (i, 0)),       # per-tile indices
            pl.BlockSpec((V, e_pad), lambda i: (0, 0)),    # table resident in VMEM
        ],
        out_specs=pl.BlockSpec((tl, e_pad), lambda i: (i, 0)),  # lane-dense out
        compiler_params=pltpu.CompilerParams(
            # Tiles along L are independent -> shard across v7x's 2 TCs.
            dimension_semantics=("parallel",),
        ),
        cost_estimate=cost,
    )(idx2d, table_padded)

    return out[:L]


# ------------------------- module-equivalent wrapper -------------------------

def sequence_int_embedding(seq: str, max_len=None) -> jnp.ndarray:
    """SequenceIntEmbeddingLayer.forward (string->int encode + truncate/pad)."""
    int_enc = [AA_DICT[aa] for aa in seq]
    if max_len is not None:
        int_enc = int_enc[:max_len]
        int_enc = int_enc + [0] * (max_len - len(int_enc))  # zero padding
    return jnp.asarray(int_enc, dtype=jnp.int32)


class SequenceLearnableEmbeddingLayerPallas:
    def __init__(self, embed_dim: int = 5, key=None):
        self.embed_dim = embed_dim
        if key is None:
            key = jax.random.PRNGKey(0)
        # nn.Embedding default init ~ N(0, 1); padding_idx=0 row is zeroed.
        table = jax.random.normal(key, (VOCAB_SIZE, embed_dim), dtype=jnp.float32)
        table = table.at[0].set(0.0)
        self.table = table  # unscaled / unpadded parameter view (for reference)

        # Fold sqrt(embed_dim) into the table once; pad columns to E_PAD=128 so
        # the kernel's output blocks are lane-dense.
        scaled = table * jnp.sqrt(jnp.float32(embed_dim))
        self.table_padded = (
            jnp.zeros((VOCAB_SIZE, E_PAD), dtype=jnp.float32)
            .at[:, :embed_dim].set(scaled)
        )

    def __call__(self, seq: str, max_len=None, requires_grad: bool = True):
        # requires_grad only toggles autograd in PyTorch; forward math identical.
        seq_rep = sequence_int_embedding(seq, max_len=max_len)
        out_padded = pallas_embedding_lookup(seq_rep, self.table_padded)
        return out_padded[:, :self.embed_dim]


if __name__ == "__main__":
    layer = SequenceLearnableEmbeddingLayerPallas(embed_dim=5,
                                                  key=jax.random.PRNGKey(0))

    # Small deterministic example: 6 residues padded to max_len=8.
    seq = "ARNDCQ"
    max_len = 8
    out = jax.block_until_ready(layer(seq, max_len=max_len))

    # Pure-JAX reference: gather + scale (identical semantics to nn.Embedding).
    idx_ref = sequence_int_embedding(seq, max_len=max_len)
    ref = layer.table[idx_ref] * jnp.sqrt(jnp.float32(layer.embed_dim))

    assert out.shape == (max_len, layer.embed_dim), out.shape
    assert out.dtype == jnp.float32
    assert jnp.allclose(out, ref, atol=1e-5, rtol=1e-5), "mismatch vs reference"
    # Padding rows (index 0) must be exactly zero.
    assert jnp.all(out[len(seq):] == 0.0)

    # Longer sequence (no max_len) exercises bucketing + multi-tile grid path.
    long_seq = (AA * 40)[:777]          # bucket=1024, TL=512, grid=(2,)
    out2 = jax.block_until_ready(layer(long_seq))
    idx2 = sequence_int_embedding(long_seq)
    ref2 = layer.table[idx2] * jnp.sqrt(jnp.float32(layer.embed_dim))
    assert out2.shape == (777, layer.embed_dim)
    assert jnp.allclose(out2, ref2, atol=1e-5, rtol=1e-5), "mismatch (long seq)"

    print("KERNEL_OK")
</pallas_src>

<mosaic_0001>
module attributes {stable_mosaic.version = 11 : i64} {
  func.func @_embed_kernel(%arg0: i32, %arg1: memref<128x1xi32, #tpu.memory_space<vmem>>, %arg2: memref<21x128xf32, #tpu.memory_space<vmem>>, %arg3: memref<128x128xf32, #tpu.memory_space<vmem>>) attributes {dimension_semantics = [#tpu.dimension_semantics<parallel>], iteration_bounds = array<i64: 1>, scalar_prefetch = 0 : i64, scratch_operands = 0 : i64, tpu.core_type = #tpu.core_type<tc>, window_params = [{transform_indices = @transform_0, window_bounds = array<i64: 128, 1>}, {pipeline_mode = #tpu.pipeline_mode<synchronous>, transform_indices = @transform_1, window_bounds = array<i64: 21, 128>}, {transform_indices = @transform_2, window_bounds = array<i64: 128, 128>}]} {
    %c0 = arith.constant 0 : index
    %c0_0 = arith.constant 0 : index
    %0 = vector.load %arg1[%c0, %c0_0] : memref<128x1xi32, #tpu.memory_space<vmem>>, vector<128x1xi32>
    %1 = tpu.iota {dimensions = array<i32: 1>} : vector<128x21xi32>
    %2 = vector.broadcast %0 : vector<128x1xi32> to vector<128x21xi32>
    %3 = arith.cmpi eq, %1, %2 : vector<128x21xi32>
    %4 = arith.extui %3 : vector<128x21xi1> to vector<128x21xi32>
    %5 = arith.sitofp %4 : vector<128x21xi32> to vector<128x21xf32>
    %c0_1 = arith.constant 0 : index
    %c0_2 = arith.constant 0 : index
    %6 = vector.load %arg2[%c0_1, %c0_2] : memref<21x128xf32, #tpu.memory_space<vmem>>, vector<21x128xf32>
    %cst = arith.constant dense<0.000000e+00> : vector<128x128xf32>
    %7 = tpu.matmul %5, %6, %cst {dimension_numbers = #tpu.dot_dimension_numbers<[1], [0], [0], [1], [0, 0, 1, 1], [], []>} : vector<128x21xf32>, vector<21x128xf32>, vector<128x128xf32> -> vector<128x128xf32>
    %c0_3 = arith.constant 0 : index
    %c0_4 = arith.constant 0 : index
    %8 = vector.load %arg3[%c0_3, %c0_4] : memref<128x128xf32, #tpu.memory_space<vmem>>, vector<128x128xf32>
    tpu.vector_store %arg3[%c0_3, %c0_4], %7 {strides = array<i32>} : memref<128x128xf32, #tpu.memory_space<vmem>>, vector<128x128xf32>,
    return
  }
  func.func @transform_0(%arg0: i32) -> (i32, i32) {
    %c0_i32 = arith.constant 0 : i32
    %c0_i32_0 = arith.constant 0 : i32
    return %arg0, %c0_i32 : i32, i32
  }
  func.func @transform_1(%arg0: i32) -> (i32, i32) {
    %c0_i32 = arith.constant 0 : i32
    %c0_i32_0 = arith.constant 0 : i32
    %c0_i32_1 = arith.constant 0 : i32
    return %c0_i32, %c0_i32_0 : i32, i32
  }
  func.func @transform_2(%arg0: i32) -> (i32, i32) {
    %c0_i32 = arith.constant 0 : i32
    %c0_i32_0 = arith.constant 0 : i32
    return %arg0, %c0_i32 : i32, i32
  }
}

</mosaic_0001>

<llo_original>
// kernel: tpu_custom_call.1
$region0: #{tpu_custom_call.1}
  #allocation0 [shape = 'u32[]', space=smem, size = 0x4, offset = 0x4, fixed_abs, tag = 'smem constant byte address 0x4 - core index']
  #allocation1 [shape = 'u32[144,128]{1,0:T(1,128)}', space=vmem, size = 0x12000, scoped, tag = 'internal scratch']
  %s0 = inlined_call_operand.vmem [shape: s32[128,1], index: 0, kind: input, shape index: {}]
  %s1 = inlined_call_operand.vmem [shape: f32[21,128], index: 1, kind: input, shape index: {}]
  %s2 = inlined_call_operand.hbm [shape: f32[128,128], index: 2, kind: output, shape index: {}]
  %s3 = sld [smem:[#allocation0]]
  $region18: #{tpu_custom_call.1} parent=0
    _
  %s5 = ssub.s32 1, %s3
  %s6 = scalar_select 0, %s5, %s3
  $region1: #{tpu_custom_call.1} parent=0
    #allocation2 [shape = 'u8[65536]{0}', space=vmem, size = 0x10000, scoped, tag = 'output window, operand 0, single buffered']
    #allocation3 [shape = 's32[1]{0}', space=sflag, size = 0x4, scoped, tag = 'scoped memory for tpu_custom_call.1']
    %7 = vsyncpa [#allocation3], 0
    // Predicated region
    $region2: #{tpu_custom_call.1} parent=1 // pred_check
      _
    $region3: #{tpu_custom_call.1} parent=1 // pred_check_branch
      %9 = sbr.rel (0) target = $region5
    $region4: #{tpu_custom_call.1} parent=1 // pred_region
      _
    $region5: #{tpu_custom_call.1} parent=1 // pred_fallthru
      _
    // Predicated region
    $region6: #{tpu_custom_call.1} parent=1 // pred_check
      _
    $region7: #{tpu_custom_call.1} parent=1 // pred_check_branch
      %11 = sbr.rel (0) target = $region9
    $region8: #{tpu_custom_call.1} parent=1 // pred_region
      _
    $region9: #{tpu_custom_call.1} parent=1 // pred_fallthru
      _
    %v12 = vld [vmem:[%s0] sm:$0xff]
    %v13 = vld [vmem:[%s0 + $0x8] sm:$0xff]
    %v14 = vld [vmem:[%s0 + $0x10] sm:$0xff]
    %v15 = vld [vmem:[%s0 + $0x18] sm:$0xff]
    %v16 = vld [vmem:[%s0 + $0x20] sm:$0xff]
    %v17 = vld [vmem:[%s0 + $0x28] sm:$0xff]
    %v18 = vld [vmem:[%s0 + $0x30] sm:$0xff]
    %v19 = vld [vmem:[%s0 + $0x38] sm:$0xff]
    %v20 = vld [vmem:[%s0 + $0x40] sm:$0xff]
    %v21 = vld [vmem:[%s0 + $0x48] sm:$0xff]
    %v22 = vld [vmem:[%s0 + $0x50] sm:$0xff]
    %v23 = vld [vmem:[%s0 + $0x58] sm:$0xff]
    %v24 = vld [vmem:[%s0 + $0x60] sm:$0xff]
    %v25 = vld [vmem:[%s0 + $0x68] sm:$0xff]
    %v26 = vld [vmem:[%s0 + $0x70] sm:$0xff]
    %v27 = vld [vmem:[%s0 + $0x78] sm:$0xff]
    %v28 = vlaneseq
    %v29 = vand.u32 %v28, 127
    %30 = vset.pattern.permute.xlu0 0
    %31 = vperm.xlu0 %30, %v12
    %v32 = vpop.permute.xlu0 %31
    %33 = vset.pattern.permute.xlu0 0
    %34 = vperm.xlu0 %33, %v13
    %v35 = vpop.permute.xlu0 %34
    %36 = vset.pattern.permute.xlu0 0
    %37 = vperm.xlu0 %36, %v14
    %v38 = vpop.permute.xlu0 %37
    %39 = vset.pattern.permute.xlu0 0
    %40 = vperm.xlu0 %39, %v15
    %v41 = vpop.permute.xlu0 %40
    %42 = vset.pattern.permute.xlu0 0
    %43 = vperm.xlu0 %42, %v16
    %v44 = vpop.permute.xlu0 %43
    %45 = vset.pattern.permute.xlu0 0
    %46 = vperm.xlu0 %45, %v17
    %v47 = vpop.permute.xlu0 %46
    %48 = vset.pattern.permute.xlu0 0
    %49 = vperm.xlu0 %48, %v18
    %v50 = vpop.permute.xlu0 %49
    %51 = vset.pattern.permute.xlu0 0
    %52 = vperm.xlu0 %51, %v19
    %v53 = vpop.permute.xlu0 %52
    %54 = vset.pattern.permute.xlu0 0
    %55 = vperm.xlu0 %54, %v20
    %v56 = vpop.permute.xlu0 %55
    %57 = vset.pattern.permute.xlu0 0
    %58 = vperm.xlu0 %57, %v21
    %v59 = vpop.permute.xlu0 %58
    %60 = vset.pattern.permute.xlu0 0
    %61 = vperm.xlu0 %60, %v22
    %v62 = vpop.permute.xlu0 %61
    %63 = vset.pattern.permute.xlu0 0
    %64 = vperm.xlu0 %63, %v23
    %v65 = vpop.permute.xlu0 %64
    %66 = vset.pattern.permute.xlu0 0
    %67 = vperm.xlu0 %66, %v24
    %v68 = vpop.permute.xlu0 %67
    %69 = vset.pattern.permute.xlu0 0
    %70 = vperm.xlu0 %69, %v25
    %v71 = vpop.permute.xlu0 %70
    %72 = vset.pattern.permute.xlu0 0
    %73 = vperm.xlu0 %72, %v26
    %v74 = vpop.permute.xlu0 %73
    %75 = vset.pattern.permute.xlu0 0
    %76 = vperm.xlu0 %75, %v27
    %v77 = vpop.permute.xlu0 %76
    %vm78 = vcmp.eq.s32.totalorder %v29, %v32
    %vm79 = vcmp.eq.s32.totalorder %v29, %v35
    %vm80 = vcmp.eq.s32.totalorder %v29, %v38
    %vm81 = vcmp.eq.s32.totalorder %v29, %v41
    %vm82 = vcmp.eq.s32.totalorder %v29, %v44
    %vm83 = vcmp.eq.s32.totalorder %v29, %v47
    %vm84 = vcmp.eq.s32.totalorder %v29, %v50
    %vm85 = vcmp.eq.s32.totalorder %v29, %v53
    %vm86 = vcmp.eq.s32.totalorder %v29, %v56
    %vm87 = vcmp.eq.s32.totalorder %v29, %v59
    %vm88 = vcmp.eq.s32.totalorder %v29, %v62
    %vm89 = vcmp.eq.s32.totalorder %v29, %v65
    %vm90 = vcmp.eq.s32.totalorder %v29, %v68
    %vm91 = vcmp.eq.s32.totalorder %v29, %v71
    %vm92 = vcmp.eq.s32.totalorder %v29, %v74
    %vm93 = vcmp.eq.s32.totalorder %v29, %v77
    %v94 = vsel %vm78, 1, 0
    %v95 = vsel %vm79, 1, 0
    %v96 = vsel %vm80, 1, 0
    %v97 = vsel %vm81, 1, 0
    %v98 = vsel %vm82, 1, 0
    %v99 = vsel %vm83, 1, 0
    %v100 = vsel %vm84, 1, 0
    %v101 = vsel %vm85, 1, 0
    %v102 = vsel %vm86, 1, 0
    %v103 = vsel %vm87, 1, 0
    %v104 = vsel %vm88, 1, 0
    %v105 = vsel %vm89, 1, 0
    %v106 = vsel %vm90, 1, 0
    %v107 = vsel %vm91, 1, 0
    %v108 = vsel %vm92, 1, 0
    %v109 = vsel %vm93, 1, 0
    %v110 = vcvt.s32.f32 %v94
    %v111 = vcvt.s32.f32 %v95
    %v112 = vcvt.s32.f32 %v96
    %v113 = vcvt.s32.f32 %v97
    %v114 = vcvt.s32.f32 %v98
    %v115 = vcvt.s32.f32 %v99
    %v116 = vcvt.s32.f32 %v100
    %v117 = vcvt.s32.f32 %v101
    %v118 = vcvt.s32.f32 %v102
    %v119 = vcvt.s32.f32 %v103
    %v120 = vcvt.s32.f32 %v104
    %v121 = vcvt.s32.f32 %v105
    %v122 = vcvt.s32.f32 %v106
    %v123 = vcvt.s32.f32 %v107
    %v124 = vcvt.s32.f32 %v108
    %v125 = vcvt.s32.f32 %v109
    %v126 = vld [vmem:[%s1] sm:$0xff]
    %v127 = vld [vmem:[%s1 + $0x8] sm:$0xff]
    %v128 = vld [vmem:[%s1 + $0x10] sm:$0x1f]
    %vm129 = vcmask 171008
    %v131 = vsel %vm129, %v110, 0
    %v134 = vsel %vm129, %v111, 0
    %v137 = vsel %vm129, %v112, 0
    %v140 = vsel %vm129, %v113, 0
    %v143 = vsel %vm129, %v114, 0
    %v146 = vsel %vm129, %v115, 0
    %v149 = vsel %vm129, %v116, 0
    %v152 = vsel %vm129, %v117, 0
    %v155 = vsel %vm129, %v118, 0
    %v158 = vsel %vm129, %v119, 0
    %v161 = vsel %vm129, %v120, 0
    %v164 = vsel %vm129, %v121, 0
    %v167 = vsel %vm129, %v122, 0
    %v170 = vsel %vm129, %v123, 0
    %v173 = vsel %vm129, %v124, 0
    %v176 = vsel %vm129, %v125, 0
    %vm178 = vcmask 1044480
    %v180 = vsel %vm178, %v128, 0
    %182 = vmatprep.subr.mxu0 0.0
    %183 = vmatpush1.msra.mxu0 %v126
    %184 = vmatprep.subr.mxu0 0.0
    %185 = vmatpush1.msra.mxu0 %v127
    %186 = vmatprep.subr.mxu0 0.0
    %187 = vmatpush1.msra.mxu0 %v180
    %188 = vmatprep.subr.mxu0 0.0
    %189 = vmatpush1.msra.mxu0 0.0
    %190 = vmatprep.subr.mxu0 0.0
    %191 = vmatpush1.msra.mxu0 0.0
    %192 = vmatprep.subr.mxu0 0.0
    %193 = vmatpush1.msra.mxu0 0.0
    %194 = vmatprep.subr.mxu0 0.0
    %195 = vmatpush1.msra.mxu0 0.0
    %196 = vmatprep.subr.mxu0 0.0
    %197 = vmatpush1.msra.mxu0 0.0
    %198 = vmatprep.subr.mxu0 0.0
    %199 = vmatpush1.msra.mxu0 0.0
    %200 = vmatprep.subr.mxu0 0.0
    %201 = vmatpush1.msra.mxu0 0.0
    %202 = vmatprep.subr.mxu0 0.0
    %203 = vmatpush1.msra.mxu0 0.0
    %204 = vmatprep.subr.mxu0 0.0
    %205 = vmatpush1.msra.mxu0 0.0
    %206 = vmatprep.subr.mxu0 0.0
    %207 = vmatpush1.msra.mxu0 0.0
    %208 = vmatprep.subr.mxu0 0.0
    %209 = vmatpush1.msra.mxu0 0.0
    %210 = vmatprep.subr.mxu0 0.0
    %211 = vmatpush1.msra.mxu0 0.0
    %212 = vmatprep.subr.mxu0 0.0
    %213 = vmatpush1.msra.mxu0 0.0
    %214 = vmatprep.subr.mxu0 0.0
    %215 = vmatpush1.msra.mxu0 0.0
    %216 = vmatprep.subr.mxu0 0.0
    %217 = vmatpush1.msra.mxu0 0.0
    %218 = vmatprep.subr.mxu0 0.0
    %219 = vmatpush1.msra.mxu0 0.0
    %220 = vmatprep.subr.mxu0 0.0
    %221 = vmatpush1.msra.mxu0 0.0
    %222 = vmatprep.subr.mxu0 0.0
    %223 = vmatpush1.msra.mxu0 0.0
    %224 = vmatprep.subr.mxu0 0.0
    %225 = vmatpush1.msra.mxu0 0.0
    %226 = vmatprep.subr.mxu0 0.0
    %227 = vmatpush1.msra.mxu0 0.0
    %228 = vmatprep.subr.mxu0 0.0
    %229 = vmatpush1.msra.mxu0 0.0
    %230 = vmatprep.subr.mxu0 0.0
    %231 = vmatpush1.msra.mxu0 0.0
    %232 = vmatprep.subr.mxu0 0.0
    %233 = vmatpush1.msra.mxu0 0.0
    %234 = vmatprep.subr.mxu0 0.0
    %235 = vmatpush1.msra.mxu0 0.0
    %236 = vmatprep.subr.mxu0 0.0
    %237 = vmatpush1.msra.mxu0 0.0
    %238 = vmatprep.subr.mxu0 0.0
    %239 = vmatpush1.msra.mxu0 0.0
    %240 = vmatprep.subr.mxu0 0.0
    %241 = vmatpush1.msra.mxu0 0.0
    %242 = vmatprep.subr.mxu0 0.0
    %243 = vmatpush1.msra.mxu0 0.0
    %244 = vmatprep.subr.mxu0 0.0
    %245 = vmatpush1.msra.mxu0 0.0
    %246 = vmatprep.mubr.f32.mxu0 0.0
    %247 = vmatmul.mubr.f32.gmra.mrb[0].mxu0 %v131
    %v248 = vpop.f32.mrb[0].mxu0
    %v249 = vadd.f32 0.0, %v248
    %v250 = vpop.f32.mrb[0].mxu0
    %251 = vmatprep.mubr.f32.mxu0 0.0
    %252 = vmatmul.mubr.f32.gmra.mrb[0].mxu0 %v134
    %v253 = vpop.f32.mrb[0].mxu0
    %v254 = vadd.f32 0.0, %v253
    %v255 = vpop.f32.mrb[0].mxu0
    %256 = vmatprep.mubr.f32.mxu0 0.0
    %257 = vmatmul.mubr.f32.gmra.mrb[0].mxu0 %v137
    %v258 = vpop.f32.mrb[0].mxu0
    %v259 = vadd.f32 0.0, %v258
    %v260 = vpop.f32.mrb[0].mxu0
    %261 = vmatprep.mubr.f32.mxu0 0.0
    %262 = vmatmul.mubr.f32.gmra.mrb[0].mxu0 %v140
    %v263 = vpop.f32.mrb[0].mxu0
    %v264 = vadd.f32 0.0, %v263
    %v265 = vpop.f32.mrb[0].mxu0
    %266 = vmatprep.mubr.f32.mxu0 0.0
    %267 = vmatmul.mubr.f32.gmra.mrb[0].mxu0 %v143
    %v268 = vpop.f32.mrb[0].mxu0
    %v269 = vadd.f32 0.0, %v268
    %v270 = vpop.f32.mrb[0].mxu0
    %271 = vmatprep.mubr.f32.mxu0 0.0
    %272 = vmatmul.mubr.f32.gmra.mrb[0].mxu0 %v146
    %v273 = vpop.f32.mrb[0].mxu0
    %v274 = vadd.f32 0.0, %v273
    %v275 = vpop.f32.mrb[0].mxu0
    %276 = vmatprep.mubr.f32.mxu0 0.0
    %277 = vmatmul.mubr.f32.gmra.mrb[0].mxu0 %v149
    %v278 = vpop.f32.mrb[0].mxu0
    %v279 = vadd.f32 0.0, %v278
    %v280 = vpop.f32.mrb[0].mxu0
    %281 = vmatprep.mubr.f32.mxu0 0.0
    %282 = vmatmul.mubr.f32.gmra.mrb[0].mxu0 %v152
    %v283 = vpop.f32.mrb[0].mxu0
    %v284 = vadd.f32 0.0, %v283
    %v285 = vpop.f32.mrb[0].mxu0
    %286 = vmatprep.mubr.f32.mxu0 0.0
    %287 = vmatmul.mubr.f32.gmra.mrb[0].mxu0 %v155
    %v288 = vpop.f32.mrb[0].mxu0
    %v289 = vadd.f32 0.0, %v288
    %v290 = vpop.f32.mrb[0].mxu0
    %291 = vmatprep.mubr.f32.mxu0 0.0
    %292 = vmatmul.mubr.f32.gmra.mrb[0].mxu0 %v158
    %v293 = vpop.f32.mrb[0].mxu0
    %v294 = vadd.f32 0.0, %v293
    %v295 = vpop.f32.mrb[0].mxu0
    %296 = vmatprep.mubr.f32.mxu0 0.0
    %297 = vmatmul.mubr.f32.gmra.mrb[0].mxu0 %v161
    %v298 = vpop.f32.mrb[0].mxu0
    %v299 = vadd.f32 0.0, %v298
    %v300 = vpop.f32.mrb[0].mxu0
    %301 = vmatprep.mubr.f32.mxu0 0.0
    %302 = vmatmul.mubr.f32.gmra.mrb[0].mxu0 %v164
    %v303 = vpop.f32.mrb[0].mxu0
    %v304 = vadd.f32 0.0, %v303
    %v305 = vpop.f32.mrb[0].mxu0
    %306 = vmatprep.mubr.f32.mxu0 0.0
    %307 = vmatmul.mubr.f32.gmra.mrb[0].mxu0 %v167
    %v308 = vpop.f32.mrb[0].mxu0
    %v309 = vadd.f32 0.0, %v308
    %v310 = vpop.f32.mrb[0].mxu0
    %311 = vmatprep.mubr.f32.mxu0 0.0
    %312 = vmatmul.mubr.f32.gmra.mrb[0].mxu0 %v170
    %v313 = vpop.f32.mrb[0].mxu0
    %v314 = vadd.f32 0.0, %v313
    %v315 = vpop.f32.mrb[0].mxu0
    %316 = vmatprep.mubr.f32.mxu0 0.0
    %317 = vmatmul.mubr.f32.gmra.mrb[0].mxu0 %v173
    %v318 = vpop.f32.mrb[0].mxu0
    %v319 = vadd.f32 0.0, %v318
    %v320 = vpop.f32.mrb[0].mxu0
    %321 = vmatprep.mubr.f32.mxu0 0.0
    %322 = vmatmul.mubr.f32.gmra.mrb[0].mxu0 %v176
    %v323 = vpop.f32.mrb[0].mxu0
    %v324 = vadd.f32 0.0, %v323
    %v325 = vpop.f32.mrb[0].mxu0
    %326 = vdwg.mxu0
    %327 = vst [vmem:[#allocation2] sm:$0xff] %v249
    %328 = vst [vmem:[#allocation2 + $0x8] sm:$0xff] %v254
    %329 = vst [vmem:[#allocation2 + $0x10] sm:$0xff] %v259
    %330 = vst [vmem:[#allocation2 + $0x18] sm:$0xff] %v264
    %331 = vst [vmem:[#allocation2 + $0x20] sm:$0xff] %v269
    %332 = vst [vmem:[#allocation2 + $0x28] sm:$0xff] %v274
    %333 = vst [vmem:[#allocation2 + $0x30] sm:$0xff] %v279
    %334 = vst [vmem:[#allocation2 + $0x38] sm:$0xff] %v284
    %335 = vst [vmem:[#allocation2 + $0x40] sm:$0xff] %v289
    %336 = vst [vmem:[#allocation2 + $0x48] sm:$0xff] %v294
    %337 = vst [vmem:[#allocation2 + $0x50] sm:$0xff] %v299
    %338 = vst [vmem:[#allocation2 + $0x58] sm:$0xff] %v304
    %339 = vst [vmem:[#allocation2 + $0x60] sm:$0xff] %v309
    %340 = vst [vmem:[#allocation2 + $0x68] sm:$0xff] %v314
    %341 = vst [vmem:[#allocation2 + $0x70] sm:$0xff] %v319
    %342 = vst [vmem:[#allocation2 + $0x78] sm:$0xff] %v324
    // Predicated region
    $region10: #{tpu_custom_call.1} parent=1 // pred_check
      _
    $region11: #{tpu_custom_call.1} parent=1 // pred_check_branch
      %344 = sbr.rel (0) target = $region13
    $region12: #{tpu_custom_call.1} parent=1 // pred_region
      %s346 = ssub.s32 2048, 2048
      %347 = vsyncadd [#allocation3], %s346
      %s348 = sshll.u32 [#allocation2], 4
      %s349 = int_to_ptr.vmem [resolvable:$true] %s348
      %354 = dma.vmem_to_hbm [thread:$0]  %s349, 2048, %s2, [#allocation3], 128, 128, 8
    $region13: #{tpu_custom_call.1} parent=1 // pred_fallthru
      _
    // Predicated region
    $region14: #{tpu_custom_call.1} parent=1 // pred_check
      _
    $region15: #{tpu_custom_call.1} parent=1 // pred_check_branch
      %356 = sbr.rel (0) target = $region17
    $region16: #{tpu_custom_call.1} parent=1 // pred_region
      %357 = dma.done [#allocation3], 2048
    $region17: #{tpu_custom_call.1} parent=1 // pred_fallthru
      _
    %358 = vsyncpa [#allocation3], 1

</llo_original>
